<compile_context>
chip_gen: v7x
topology: tpu7x:2x2x1
jax: 0.10.0
libtpu: 0.0.40
codegen_flags: <defaults>
</compile_context>

<pallas_src>
import functools

import jax
import jax.numpy as jnp
from jax.experimental import pallas as pl
from jax.experimental.pallas import tpu as pltpu


def _round_up(x: int, m: int) -> int:
    return ((x + m - 1) // m) * m


def _tpu_generation() -> int:
    """Best-effort TPU generation detection (used only for static tuning knobs)."""
    try:
        kind = jax.devices()[0].device_kind.lower()
    except Exception:
        return 6
    if "v7" in kind:
        return 7
    if "v6" in kind:
        return 6
    if "v5" in kind or "v4" in kind:
        return 5
    return 6  # unknown: assume bf16 VALU available, single TensorCore


def _qnet_kernel(x_ref, w1_ref, b1_ref, w2_ref, b2_ref, w3_ref, b3_ref, o_ref,
                 *, act_dtype):
    """Fused 3-layer MLP on one batch tile.

    bf16 MXU matmuls with f32 accumulation; bias-add + ReLU in `act_dtype`
    (bf16 on v6e/v7x to halve vreg/spill pressure, f32 on v5e).
    """
    x = x_ref[...].astype(jnp.bfloat16)                              # [tb, in]

    h = jnp.dot(x, w1_ref[...], preferred_element_type=jnp.float32)
    h = jnp.maximum(h.astype(act_dtype) + b1_ref[...].astype(act_dtype), 0.0)
    h = h.astype(jnp.bfloat16)                                       # [tb, 256]

    h = jnp.dot(h, w2_ref[...], preferred_element_type=jnp.float32)
    h = jnp.maximum(h.astype(act_dtype) + b2_ref[...].astype(act_dtype), 0.0)
    h = h.astype(jnp.bfloat16)                                       # [tb, 256]

    out = jnp.dot(h, w3_ref[...], preferred_element_type=jnp.float32) + b3_ref[...]
    o_ref[...] = out.astype(o_ref.dtype)                             # [tb, out]


def prepare_params(params):
    """One-time layout prep (hoisted out of the per-call path).

    Weights (PyTorch [out, in]) -> [in, out] bf16 for native MXU matmuls;
    biases -> f32 row vectors [1, out].
    """
    return {
        "w1": jnp.asarray(params["w1"]).T.astype(jnp.bfloat16),
        "w2": jnp.asarray(params["w2"]).T.astype(jnp.bfloat16),
        "w3": jnp.asarray(params["w3"]).T.astype(jnp.bfloat16),
        "b1": jnp.asarray(params["b1"], jnp.float32).reshape(1, -1),
        "b2": jnp.asarray(params["b2"], jnp.float32).reshape(1, -1),
        "b3": jnp.asarray(params["b3"], jnp.float32).reshape(1, -1),
    }


@functools.partial(jax.jit, static_argnames=("block_b", "num_tc", "use_bf16_act"))
def _qnetwork_forward_impl(x, prepped, block_b, num_tc, use_bf16_act):
    x = x.astype(jnp.float32)
    B, input_dim = x.shape
    hidden = prepped["w1"].shape[1]          # 256
    output_dim = prepped["w3"].shape[1]

    # --- batch tiling ---------------------------------------------------------
    # Single-TC chips (v5e/v6e): one grid step whenever B fits (no per-step
    # overhead).  v7x (2 TCs): split into two steps so both cores get work.
    # Tiles are multiples of 16 (native bf16 sublane tile) when B is tiled.
    if B <= block_b:
        if num_tc >= 2 and B >= 32:
            tb = _round_up(pl.cdiv(B, 2), 16)
        else:
            tb = B                            # block dim == full dim -> always legal
    else:
        tb = block_b                          # multiple of 16
    grid = (pl.cdiv(B, tb),)

    # Weights/biases: full-extent blocks with a constant index_map -> resident
    # in VMEM across grid steps (no re-DMA on revisit).
    full = lambda r, c: pl.BlockSpec((r, c), lambda i: (0, 0))

    kernel = functools.partial(
        _qnet_kernel,
        act_dtype=jnp.bfloat16 if use_bf16_act else jnp.float32)

    return pl.pallas_call(
        kernel,
        out_shape=jax.ShapeDtypeStruct((B, output_dim), jnp.float32),
        grid_spec=pltpu.PrefetchScalarGridSpec(
            num_scalar_prefetch=0,
            grid=grid,
            in_specs=[
                pl.BlockSpec((tb, input_dim), lambda i: (i, 0)),   # x (unpadded f32)
                full(input_dim, hidden), full(1, hidden),          # w1, b1
                full(hidden, hidden),    full(1, hidden),          # w2, b2
                full(hidden, output_dim), full(1, output_dim),     # w3, b3
            ],
            out_specs=pl.BlockSpec((tb, output_dim), lambda i: (i, 0)),
        ),
        compiler_params=pltpu.CompilerParams(
            dimension_semantics=("parallel",)),
    )(x, prepped["w1"], prepped["b1"], prepped["w2"], prepped["b2"],
      prepped["w3"], prepped["b3"])


def qnetwork_forward(x, prepped, block_b=512):
    """Pallas forward pass of Qnetwork. `prepped` comes from prepare_params()."""
    gen = _tpu_generation()
    return _qnetwork_forward_impl(
        x, prepped,
        block_b=block_b,
        num_tc=2 if gen >= 7 else 1,
        use_bf16_act=gen >= 6)


def init_qnetwork_params(key, input_dim, output_dim, hidden=256):
    """Deterministic init mimicking PyTorch nn.Linear (uniform +/- 1/sqrt(fan_in))."""
    ks = jax.random.split(key, 6)

    def linear(kw, kb, fan_in, fan_out):
        bound = 1.0 / jnp.sqrt(fan_in)
        w = jax.random.uniform(kw, (fan_out, fan_in), jnp.float32, -bound, bound)
        b = jax.random.uniform(kb, (fan_out,), jnp.float32, -bound, bound)
        return w, b

    w1, b1 = linear(ks[0], ks[1], input_dim, hidden)
    w2, b2 = linear(ks[2], ks[3], hidden, hidden)
    w3, b3 = linear(ks[4], ks[5], hidden, output_dim)
    return {"w1": w1, "b1": b1, "w2": w2, "b2": b2, "w3": w3, "b3": b3}


def _reference_forward(x, p):
    h1 = jax.nn.relu(x @ p["w1"].T + p["b1"])
    h2 = jax.nn.relu(h1 @ p["w2"].T + p["b2"])
    return h2 @ p["w3"].T + p["b3"]


if __name__ == "__main__":
    key = jax.random.PRNGKey(0)
    k_x, k_p = jax.random.split(key)

    batch, input_dim, output_dim = 8, 32, 8
    x = jax.random.normal(k_x, (batch, input_dim), dtype=jnp.float32)
    params = init_qnetwork_params(k_p, input_dim, output_dim)
    prepped = prepare_params(params)        # one-time weight layout prep

    out = qnetwork_forward(x, prepped)
    out = jax.block_until_ready(out)

    ref = _reference_forward(x, params)
    assert out.shape == (batch, output_dim)
    assert bool(jnp.all(jnp.isfinite(out)))
    # bf16 matmul operands (and bf16 bias/ReLU on v6e/v7x) vs f32 reference:
    # tolerance at bf16 operand precision.
    assert jnp.allclose(out, ref, atol=5e-2, rtol=5e-2)

    print("KERNEL_OK")
</pallas_src>

<mosaic_0001>
module attributes {stable_mosaic.version = 11 : i64} {
  func.func @_qnet_kernel(%arg0: i32, %arg1: memref<8x32xf32, #tpu.memory_space<vmem>>, %arg2: memref<32x256xbf16, #tpu.memory_space<vmem>>, %arg3: memref<1x256xf32, #tpu.memory_space<vmem>>, %arg4: memref<256x256xbf16, #tpu.memory_space<vmem>>, %arg5: memref<1x256xf32, #tpu.memory_space<vmem>>, %arg6: memref<256x8xbf16, #tpu.memory_space<vmem>>, %arg7: memref<1x8xf32, #tpu.memory_space<vmem>>, %arg8: memref<8x8xf32, #tpu.memory_space<vmem>>) attributes {dimension_semantics = [#tpu.dimension_semantics<parallel>], iteration_bounds = array<i64: 1>, scalar_prefetch = 0 : i64, scratch_operands = 0 : i64, tpu.core_type = #tpu.core_type<tc>, window_params = [{transform_indices = @transform_0, window_bounds = array<i64: 8, 32>}, {pipeline_mode = #tpu.pipeline_mode<synchronous>, transform_indices = @transform_1, window_bounds = array<i64: 32, 256>}, {pipeline_mode = #tpu.pipeline_mode<synchronous>, transform_indices = @transform_2, window_bounds = array<i64: 1, 256>}, {pipeline_mode = #tpu.pipeline_mode<synchronous>, transform_indices = @transform_3, window_bounds = array<i64: 256, 256>}, {pipeline_mode = #tpu.pipeline_mode<synchronous>, transform_indices = @transform_4, window_bounds = array<i64: 1, 256>}, {pipeline_mode = #tpu.pipeline_mode<synchronous>, transform_indices = @transform_5, window_bounds = array<i64: 256, 8>}, {pipeline_mode = #tpu.pipeline_mode<synchronous>, transform_indices = @transform_6, window_bounds = array<i64: 1, 8>}, {transform_indices = @transform_7, window_bounds = array<i64: 8, 8>}]} {
    %c0 = arith.constant 0 : index
    %c0_0 = arith.constant 0 : index
    %0 = vector.load %arg1[%c0, %c0_0] : memref<8x32xf32, #tpu.memory_space<vmem>>, vector<8x32xf32>
    %1 = arith.truncf %0 : vector<8x32xf32> to vector<8x32xbf16>
    %c0_1 = arith.constant 0 : index
    %c0_2 = arith.constant 0 : index
    %2 = vector.load %arg2[%c0_1, %c0_2] : memref<32x256xbf16, #tpu.memory_space<vmem>>, vector<32x256xbf16>
    %cst = arith.constant dense<0.000000e+00> : vector<8x256xf32>
    %3 = tpu.matmul %1, %2, %cst {dimension_numbers = #tpu.dot_dimension_numbers<[1], [0], [0], [1], [0, 0, 1, 1], [], []>} : vector<8x32xbf16>, vector<32x256xbf16>, vector<8x256xf32> -> vector<8x256xf32>
    %4 = arith.truncf %3 : vector<8x256xf32> to vector<8x256xbf16>
    %c0_3 = arith.constant 0 : index
    %c0_4 = arith.constant 0 : index
    %5 = vector.load %arg3[%c0_3, %c0_4] : memref<1x256xf32, #tpu.memory_space<vmem>>, vector<1x256xf32>
    %6 = arith.truncf %5 : vector<1x256xf32> to vector<1x256xbf16>
    %7 = vector.broadcast %6 : vector<1x256xbf16> to vector<8x256xbf16>
    %8 = arith.addf %4, %7 : vector<8x256xbf16>
    %cst_5 = arith.constant 0.000000e+00 : bf16
    %9 = vector.broadcast %cst_5 : bf16 to vector<8x256xbf16>
    %10 = arith.maximumf %8, %9 : vector<8x256xbf16>
    %c0_6 = arith.constant 0 : index
    %c0_7 = arith.constant 0 : index
    %11 = vector.load %arg4[%c0_6, %c0_7] : memref<256x256xbf16, #tpu.memory_space<vmem>>, vector<256x256xbf16>
    %cst_8 = arith.constant dense<0.000000e+00> : vector<8x256xf32>
    %12 = tpu.matmul %10, %11, %cst_8 {dimension_numbers = #tpu.dot_dimension_numbers<[1], [0], [0], [1], [0, 0, 1, 1], [], []>} : vector<8x256xbf16>, vector<256x256xbf16>, vector<8x256xf32> -> vector<8x256xf32>
    %13 = arith.truncf %12 : vector<8x256xf32> to vector<8x256xbf16>
    %c0_9 = arith.constant 0 : index
    %c0_10 = arith.constant 0 : index
    %14 = vector.load %arg5[%c0_9, %c0_10] : memref<1x256xf32, #tpu.memory_space<vmem>>, vector<1x256xf32>
    %15 = arith.truncf %14 : vector<1x256xf32> to vector<1x256xbf16>
    %16 = vector.broadcast %15 : vector<1x256xbf16> to vector<8x256xbf16>
    %17 = arith.addf %13, %16 : vector<8x256xbf16>
    %cst_11 = arith.constant 0.000000e+00 : bf16
    %18 = vector.broadcast %cst_11 : bf16 to vector<8x256xbf16>
    %19 = arith.maximumf %17, %18 : vector<8x256xbf16>
    %c0_12 = arith.constant 0 : index
    %c0_13 = arith.constant 0 : index
    %20 = vector.load %arg6[%c0_12, %c0_13] : memref<256x8xbf16, #tpu.memory_space<vmem>>, vector<256x8xbf16>
    %cst_14 = arith.constant dense<0.000000e+00> : vector<8x8xf32>
    %21 = tpu.matmul %19, %20, %cst_14 {dimension_numbers = #tpu.dot_dimension_numbers<[1], [0], [0], [1], [0, 0, 1, 1], [], []>} : vector<8x256xbf16>, vector<256x8xbf16>, vector<8x8xf32> -> vector<8x8xf32>
    %c0_15 = arith.constant 0 : index
    %c0_16 = arith.constant 0 : index
    %22 = vector.load %arg7[%c0_15, %c0_16] : memref<1x8xf32, #tpu.memory_space<vmem>>, vector<1x8xf32>
    %23 = vector.broadcast %22 : vector<1x8xf32> to vector<8x8xf32>
    %24 = arith.addf %21, %23 : vector<8x8xf32>
    %c0_17 = arith.constant 0 : index
    %c0_18 = arith.constant 0 : index
    %25 = vector.load %arg8[%c0_17, %c0_18] : memref<8x8xf32, #tpu.memory_space<vmem>>, vector<8x8xf32>
    tpu.vector_store %arg8[%c0_17, %c0_18], %24 {strides = array<i32>} : memref<8x8xf32, #tpu.memory_space<vmem>>, vector<8x8xf32>,
    return
  }
  func.func @transform_0(%arg0: i32) -> (i32, i32) {
    %c0_i32 = arith.constant 0 : i32
    %c0_i32_0 = arith.constant 0 : i32
    return %arg0, %c0_i32 : i32, i32
  }
  func.func @transform_1(%arg0: i32) -> (i32, i32) {
    %c0_i32 = arith.constant 0 : i32
    %c0_i32_0 = arith.constant 0 : i32
    %c0_i32_1 = arith.constant 0 : i32
    return %c0_i32, %c0_i32_0 : i32, i32
  }
  func.func @transform_2(%arg0: i32) -> (i32, i32) {
    %c0_i32 = arith.constant 0 : i32
    %c0_i32_0 = arith.constant 0 : i32
    %c0_i32_1 = arith.constant 0 : i32
    return %c0_i32, %c0_i32_0 : i32, i32
  }
  func.func @transform_3(%arg0: i32) -> (i32, i32) {
    %c0_i32 = arith.constant 0 : i32
    %c0_i32_0 = arith.constant 0 : i32
    %c0_i32_1 = arith.constant 0 : i32
    return %c0_i32, %c0_i32_0 : i32, i32
  }
  func.func @transform_4(%arg0: i32) -> (i32, i32) {
    %c0_i32 = arith.constant 0 : i32
    %c0_i32_0 = arith.constant 0 : i32
    %c0_i32_1 = arith.constant 0 : i32
    return %c0_i32, %c0_i32_0 : i32, i32
  }
  func.func @transform_5(%arg0: i32) -> (i32, i32) {
    %c0_i32 = arith.constant 0 : i32
    %c0_i32_0 = arith.constant 0 : i32
    %c0_i32_1 = arith.constant 0 : i32
    return %c0_i32, %c0_i32_0 : i32, i32
  }
  func.func @transform_6(%arg0: i32) -> (i32, i32) {
    %c0_i32 = arith.constant 0 : i32
    %c0_i32_0 = arith.constant 0 : i32
    %c0_i32_1 = arith.constant 0 : i32
    return %c0_i32, %c0_i32_0 : i32, i32
  }
  func.func @transform_7(%arg0: i32) -> (i32, i32) {
    %c0_i32 = arith.constant 0 : i32
    %c0_i32_0 = arith.constant 0 : i32
    return %arg0, %c0_i32 : i32, i32
  }
}

</mosaic_0001>

<llo_original>
// kernel: _qnetwork_forward_impl.1
$region0: #{_qnetwork_forward_impl.1}
  #allocation0 [shape = 'u32[]', space=smem, size = 0x4, offset = 0x4, fixed_abs, tag = 'smem constant byte address 0x4 - core index']
  #allocation1 [shape = 'u32[144,128]{1,0:T(1,128)}', space=vmem, size = 0x12000, scoped, tag = 'internal scratch']
  %s0 = inlined_call_operand.vmem [shape: f32[8,32], index: 0, kind: input, shape index: {}]
  %s1 = inlined_call_operand.vmem [shape: bf16[32,256], index: 1, kind: input, shape index: {}]
  %s2 = inlined_call_operand.vmem [shape: f32[1,256], index: 2, kind: input, shape index: {}]
  %s3 = inlined_call_operand.hbm [shape: bf16[256,256], index: 3, kind: input, shape index: {}]
  %s4 = inlined_call_operand.vmem [shape: f32[1,256], index: 4, kind: input, shape index: {}]
  %s5 = inlined_call_operand.vmem [shape: bf16[256,8], index: 5, kind: input, shape index: {}]
  %s6 = inlined_call_operand.vmem [shape: f32[1,8], index: 6, kind: input, shape index: {}]
  %s7 = inlined_call_operand.hbm [shape: f32[8,8], index: 7, kind: output, shape index: {}]
  %s8 = sld [smem:[#allocation0]]
  $region42: #{_qnetwork_forward_impl.1} parent=0
    _
  %s10 = ssub.s32 1, %s8
  %s11 = scalar_select 0, %s10, %s8
  $region1: #{_qnetwork_forward_impl.1} parent=0
    #allocation2 [shape = 'u8[131072]{0}', space=vmem, size = 0x20000, scoped, tag = 'input window, operand 3, single buffered']
    #allocation3 [shape = 's32[1]{0}', space=sflag, size = 0x4, scoped, tag = 'scoped memory for _qnetwork_forward_impl.1']
    #allocation4 [shape = 's32[1]{0}', space=sflag, size = 0x4, scoped, tag = 'scoped memory for _qnetwork_forward_impl.1']
    #allocation5 [shape = 'u8[4096]{0}', space=vmem, size = 0x1000, scoped, tag = 'output window, operand 0, single buffered']
    %12 = vsyncpa [#allocation3], 0
    %13 = vsyncpa [#allocation4], 0
    // Predicated region
    $region2: #{_qnetwork_forward_impl.1} parent=1 // pred_check
      _
    $region3: #{_qnetwork_forward_impl.1} parent=1 // pred_check_branch
      %15 = sbr.rel (0) target = $region5
    $region4: #{_qnetwork_forward_impl.1} parent=1 // pred_region
      _
    $region5: #{_qnetwork_forward_impl.1} parent=1 // pred_fallthru
      _
    // Predicated region
    $region6: #{_qnetwork_forward_impl.1} parent=1 // pred_check
      _
    $region7: #{_qnetwork_forward_impl.1} parent=1 // pred_check_branch
      %17 = sbr.rel (0) target = $region9
    $region8: #{_qnetwork_forward_impl.1} parent=1 // pred_region
      _
    $region9: #{_qnetwork_forward_impl.1} parent=1 // pred_fallthru
      _
    // Predicated region
    $region10: #{_qnetwork_forward_impl.1} parent=1 // pred_check
      _
    $region11: #{_qnetwork_forward_impl.1} parent=1 // pred_check_branch
      %19 = sbr.rel (0) target = $region13
    $region12: #{_qnetwork_forward_impl.1} parent=1 // pred_region
      _
    $region13: #{_qnetwork_forward_impl.1} parent=1 // pred_fallthru
      _
    // Predicated region
    $region14: #{_qnetwork_forward_impl.1} parent=1 // pred_check
      _
    $region15: #{_qnetwork_forward_impl.1} parent=1 // pred_check_branch
      %21 = sbr.rel (0) target = $region17
    $region16: #{_qnetwork_forward_impl.1} parent=1 // pred_region
      %s23 = ssub.s32 4096, 4096
      %24 = vsyncadd [#allocation3], %s23
      %s25 = sshll.u32 [#allocation2], 4
      %s26 = int_to_ptr.vmem [resolvable:$true] %s25
      %31 = dma.hbm_to_vmem [thread:$0]  %s3, 4096, %s26, [#allocation3], 128, 128, 8
    $region17: #{_qnetwork_forward_impl.1} parent=1 // pred_fallthru
      _
    // Predicated region
    $region18: #{_qnetwork_forward_impl.1} parent=1 // pred_check
      _
    $region19: #{_qnetwork_forward_impl.1} parent=1 // pred_check_branch
      %33 = sbr.rel (0) target = $region21
    $region20: #{_qnetwork_forward_impl.1} parent=1 // pred_region
      _
    $region21: #{_qnetwork_forward_impl.1} parent=1 // pred_fallthru
      _
    // Predicated region
    $region22: #{_qnetwork_forward_impl.1} parent=1 // pred_check
      _
    $region23: #{_qnetwork_forward_impl.1} parent=1 // pred_check_branch
      %35 = sbr.rel (0) target = $region25
    $region24: #{_qnetwork_forward_impl.1} parent=1 // pred_region
      _
    $region25: #{_qnetwork_forward_impl.1} parent=1 // pred_fallthru
      _
    // Predicated region
    $region26: #{_qnetwork_forward_impl.1} parent=1 // pred_check
      _
    $region27: #{_qnetwork_forward_impl.1} parent=1 // pred_check_branch
      %37 = sbr.rel (0) target = $region29
    $region28: #{_qnetwork_forward_impl.1} parent=1 // pred_region
      _
    $region29: #{_qnetwork_forward_impl.1} parent=1 // pred_fallthru
      _
    // Predicated region
    $region30: #{_qnetwork_forward_impl.1} parent=1 // pred_check
      _
    $region31: #{_qnetwork_forward_impl.1} parent=1 // pred_check_branch
      %39 = sbr.rel (0) target = $region33
    $region32: #{_qnetwork_forward_impl.1} parent=1 // pred_region
      %40 = dma.done [#allocation3], 4096
    $region33: #{_qnetwork_forward_impl.1} parent=1 // pred_fallthru
      _
    %v42 = vld [vmem:[%s0] sm:$0xff]
    %v43 = vpack.c.bf16 %v42, %v42
    %v44 = vld [vmem:[%s1] sm:$0xff]
    %v45 = vld [vmem:[%s1 + $0x8] sm:$0xff]
    %v46 = vld [vmem:[%s1 + $0x10] sm:$0xff]
    %v47 = vld [vmem:[%s1 + $0x18] sm:$0xff]
    %v52 = vunpack.c.l.b16 %v44
    %v53 = vunpack.c.h.b16 %v44
    %v54 = vunpack.c.l.b16 %v45
    %v55 = vunpack.c.h.b16 %v45
    %v56 = vunpack.c.l.b16 %v46
    %v57 = vunpack.c.h.b16 %v46
    %v58 = vunpack.c.l.b16 %v47
    %v59 = vunpack.c.h.b16 %v47
    %v60 = vpack.c.b16 %v54, %v52
    %v61 = vpack.c.b16 %v55, %v53
    %v62 = vpack.c.b16 %v58, %v56
    %v63 = vpack.c.b16 %v59, %v57
    %vm68 = vcmask 261120
    %v70 = vsel %vm68, %v43, 0
    %72 = vmatprep.subr.bf16.mxu0 %v61
    %73 = vmatpush1.bf16.msra.mxu0 %v60
    %74 = vmatprep.subr.bf16.mxu0 %v63
    %75 = vmatpush1.bf16.msra.mxu0 %v62
    %76 = vmatprep.subr.bf16.mxu0 0
    %77 = vmatpush1.bf16.msra.mxu0 0
    %78 = vmatprep.subr.bf16.mxu0 0
    %79 = vmatpush1.bf16.msra.mxu0 0
    %80 = vmatprep.subr.bf16.mxu0 0
    %81 = vmatpush1.bf16.msra.mxu0 0
    %82 = vmatprep.subr.bf16.mxu0 0
    %83 = vmatpush1.bf16.msra.mxu0 0
    %84 = vmatprep.subr.bf16.mxu0 0
    %85 = vmatpush1.bf16.msra.mxu0 0
    %86 = vmatprep.subr.bf16.mxu0 0
    %87 = vmatpush1.bf16.msra.mxu0 0
    %88 = vmatprep.subr.bf16.mxu0 0
    %89 = vmatpush1.bf16.msra.mxu0 0
    %90 = vmatprep.subr.bf16.mxu0 0
    %91 = vmatpush1.bf16.msra.mxu0 0
    %92 = vmatprep.subr.bf16.mxu0 0
    %93 = vmatpush1.bf16.msra.mxu0 0
    %94 = vmatprep.subr.bf16.mxu0 0
    %95 = vmatpush1.bf16.msra.mxu0 0
    %96 = vmatprep.subr.bf16.mxu0 0
    %97 = vmatpush1.bf16.msra.mxu0 0
    %98 = vmatprep.subr.bf16.mxu0 0
    %99 = vmatpush1.bf16.msra.mxu0 0
    %100 = vmatprep.subr.bf16.mxu0 0
    %101 = vmatpush1.bf16.msra.mxu0 0
    %102 = vmatprep.subr.bf16.mxu0 0
    %103 = vmatpush1.bf16.msra.mxu0 0
    %104 = vmatprep.mubr.bf16.mxu0 0
    %105 = vmatmul.mubr.bf16.gmra.mrb[0].mxu0 %v70
    %v106 = vpop.f32.mrb[0].mxu0
    %v107 = vadd.f32 0.0, %v106
    %v108 = vpop.f32.mrb[0].mxu0
    %v109 = vadd.f32 0.0, %v108
    %v110 = vpop.f32.mrb[0].mxu0
    %v111 = vpop.f32.mrb[0].mxu0
    %112 = vdwg.mxu0
    %v113 = vpack.c.bf16 %v107, %v107
    %v114 = vpack.c.bf16 %v109, %v109
    %v115 = vld [vmem:[%s2] sm:$0x3]
    %v117 = vlaneseq
    %v118 = vshrl.u32 %v117, 7
    %v119 = vsub.s32 0, %v118
    %v120 = vrot.slane %v115, %v119
    %v121 = vlaneseq
    %v122 = vshrl.u32 %v121, 7
    %v123 = vsub.s32 1, %v122
    %v124 = vrot.slane %v115, %v123
    %v127 = vpack.c.bf16 %v120, %v120
    %v128 = vpack.c.bf16 %v124, %v124
    %v130 = vpack.i.b16 %v127, %v127
    %v132 = vlaneseq
    %v133 = vshrl.u32 %v132, 7
    %v134 = vsub.s32 0, %v133
    %v135 = vrot.slane %v130, %v134
    %v137 = vpack.i.b16 %v128, %v128
    %v139 = vlaneseq
    %v140 = vshrl.u32 %v139, 7
    %v141 = vsub.s32 0, %v140
    %v142 = vrot.slane %v137, %v141
    %v143 = vadd.bf16 %v113, %v135
    %v144 = vadd.bf16 %v114, %v142
    %v145 = vmax.bf16 %v143, 0
    %v146 = vmax.bf16 %v144, 0
    %v147 = vld [vmem:[#allocation2] sm:$0xff]
    %v148 = vld [vmem:[#allocation2 + $0x8] sm:$0xff]
    %v149 = vld [vmem:[#allocation2 + $0x10] sm:$0xff]
    %v150 = vld [vmem:[#allocation2 + $0x18] sm:$0xff]
    %v151 = vld [vmem:[#allocation2 + $0x20] sm:$0xff]
    %v152 = vld [vmem:[#allocation2 + $0x28] sm:$0xff]
    %v153 = vld [vmem:[#allocation2 + $0x30] sm:$0xff]
    %v154 = vld [vmem:[#allocation2 + $0x38] sm:$0xff]
    %v155 = vld [vmem:[#allocation2 + $0x40] sm:$0xff]
    %v156 = vld [vmem:[#allocation2 + $0x48] sm:$0xff]
    %v157 = vld [vmem:[#allocation2 + $0x50] sm:$0xff]
    %v158 = vld [vmem:[#allocation2 + $0x58] sm:$0xff]
    %v159 = vld [vmem:[#allocation2 + $0x60] sm:$0xff]
    %v160 = vld [vmem:[#allocation2 + $0x68] sm:$0xff]
    %v161 = vld [vmem:[#allocation2 + $0x70] sm:$0xff]
    %v162 = vld [vmem:[#allocation2 + $0x78] sm:$0xff]
    %v163 = vld [vmem:[#allocation2 + $0x80] sm:$0xff]
    %v164 = vld [vmem:[#allocation2 + $0x88] sm:$0xff]
    %v165 = vld [vmem:[#allocation2 + $0x90] sm:$0xff]
    %v166 = vld [vmem:[#allocation2 + $0x98] sm:$0xff]
    %v167 = vld [vmem:[#allocation2 + $0xa0] sm:$0xff]
    %v168 = vld [vmem:[#allocation2 + $0xa8] sm:$0xff]
    %v169 = vld [vmem:[#allocation2 + $0xb0] sm:$0xff]
    %v170 = vld [vmem:[#allocation2 + $0xb8] sm:$0xff]
    %v171 = vld [vmem:[#allocation2 + $0xc0] sm:$0xff]
    %v172 = vld [vmem:[#allocation2 + $0xc8] sm:$0xff]
    %v173 = vld [vmem:[#allocation2 + $0xd0] sm:$0xff]
    %v174 = vld [vmem:[#allocation2 + $0xd8] sm:$0xff]
    %v175 = vld [vmem:[#allocation2 + $0xe0] sm:$0xff]
    %v176 = vld [vmem:[#allocation2 + $0xe8] sm:$0xff]
    %v177 = vld [vmem:[#allocation2 + $0xf0] sm:$0xff]
    %v178 = vld [vmem:[#allocation2 + $0xf8] sm:$0xff]
    %v211 = vunpack.c.l.b16 %v147
    %v212 = vunpack.c.h.b16 %v147
    %v213 = vunpack.c.l.b16 %v148
    %v214 = vunpack.c.h.b16 %v148
    %v215 = vunpack.c.l.b16 %v149
    %v216 = vunpack.c.h.b16 %v149
    %v217 = vunpack.c.l.b16 %v150
    %v218 = vunpack.c.h.b16 %v150
    %v219 = vunpack.c.l.b16 %v151
    %v220 = vunpack.c.h.b16 %v151
    %v221 = vunpack.c.l.b16 %v152
    %v222 = vunpack.c.h.b16 %v152
    %v223 = vunpack.c.l.b16 %v153
    %v224 = vunpack.c.h.b16 %v153
    %v225 = vunpack.c.l.b16 %v154
    %v226 = vunpack.c.h.b16 %v154
    %v227 = vunpack.c.l.b16 %v155
    %v228 = vunpack.c.h.b16 %v155
    %v229 = vunpack.c.l.b16 %v156
    %v230 = vunpack.c.h.b16 %v156
    %v231 = vunpack.c.l.b16 %v157
    %v232 = vunpack.c.h.b16 %v157
    %v233 = vunpack.c.l.b16 %v158
    %v234 = vunpack.c.h.b16 %v158
    %v235 = vunpack.c.l.b16 %v159
    %v236 = vunpack.c.h.b16 %v159
    %v237 = vunpack.c.l.b16 %v160
    %v238 = vunpack.c.h.b16 %v160
    %v239 = vunpack.c.l.b16 %v161
    %v240 = vunpack.c.h.b16 %v161
    %v241 = vunpack.c.l.b16 %v162
    %v242 = vunpack.c.h.b16 %v162
    %v243 = vunpack.c.l.b16 %v163
    %v244 = vunpack.c.h.b16 %v163
    %v245 = vunpack.c.l.b16 %v164
    %v246 = vunpack.c.h.b16 %v164
    %v247 = vunpack.c.l.b16 %v165
    %v248 = vunpack.c.h.b16 %v165
    %v249 = vunpack.c.l.b16 %v166
    %v250 = vunpack.c.h.b16 %v166
    %v251 = vunpack.c.l.b16 %v167
    %v252 = vunpack.c.h.b16 %v167
    %v253 = vunpack.c.l.b16 %v168
    %v254 = vunpack.c.h.b16 %v168
    %v255 = vunpack.c.l.b16 %v169
    %v256 = vunpack.c.h.b16 %v169
    %v257 = vunpack.c.l.b16 %v170
    %v258 = vunpack.c.h.b16 %v170
    %v259 = vunpack.c.l.b16 %v171
    %v260 = vunpack.c.h.b16 %v171
    %v261 = vunpack.c.l.b16 %v172
    %v262 = vunpack.c.h.b16 %v172
    %v263 = vunpack.c.l.b16 %v173
    %v264 = vunpack.c.h.b16 %v173
    %v265 = vunpack.c.l.b16 %v174
    %v266 = vunpack.c.h.b16 %v174
    %v267 = vunpack.c.l.b16 %v175
    %v268 = vunpack.c.h.b16 %v175
    %v269 = vunpack.c.l.b16 %v176
    %v270 = vunpack.c.h.b16 %v176
    %v271 = vunpack.c.l.b16 %v177
    %v272 = vunpack.c.h.b16 %v177
    %v273 = vunpack.c.l.b16 %v178
    %v274 = vunpack.c.h.b16 %v178
    %v275 = vpack.c.b16 %v213, %v211
    %v276 = vpack.c.b16 %v214, %v212
    %v277 = vpack.c.b16 %v217, %v215
    %v278 = vpack.c.b16 %v218, %v216
    %v279 = vpack.c.b16 %v221, %v219
    %v280 = vpack.c.b16 %v222, %v220
    %v281 = vpack.c.b16 %v225, %v223
    %v282 = vpack.c.b16 %v226, %v224
    %v283 = vpack.c.b16 %v229, %v227
    %v284 = vpack.c.b16 %v230, %v228
    %v285 = vpack.c.b16 %v233, %v231
    %v286 = vpack.c.b16 %v234, %v232
    %v287 = vpack.c.b16 %v237, %v235
    %v288 = vpack.c.b16 %v238, %v236
    %v289 = vpack.c.b16 %v241, %v239
    %v290 = vpack.c.b16 %v242, %v240
    %v291 = vpack.c.b16 %v245, %v243
    %v292 = vpack.c.b16 %v246, %v244
    %v293 = vpack.c.b16 %v249, %v247
    %v294 = vpack.c.b16 %v250, %v248
    %v295 = vpack.c.b16 %v253, %v251
    %v296 = vpack.c.b16 %v254, %v252
    %v297 = vpack.c.b16 %v257, %v255
    %v298 = vpack.c.b16 %v258, %v256
    %v299 = vpack.c.b16 %v261, %v259
    %v300 = vpack.c.b16 %v262, %v260
    %v301 = vpack.c.b16 %v265, %v263
    %v302 = vpack.c.b16 %v266, %v264
    %v303 = vpack.c.b16 %v269, %v267
    %v304 = vpack.c.b16 %v270, %v268
    %v305 = vpack.c.b16 %v273, %v271
    %v306 = vpack.c.b16 %v274, %v272
    %339 = vmatprep.subr.bf16.mxu0 %v276
    %340 = vmatpush1.bf16.msra.mxu0 %v275
    %341 = vmatprep.subr.bf16.mxu0 %v278
    %342 = vmatpush1.bf16.msra.mxu0 %v277
    %343 = vmatprep.subr.bf16.mxu0 %v280
    %344 = vmatpush1.bf16.msra.mxu0 %v279
    %345 = vmatprep.subr.bf16.mxu0 %v282
    %346 = vmatpush1.bf16.msra.mxu0 %v281
    %347 = vmatprep.subr.bf16.mxu0 %v284
    %348 = vmatpush1.bf16.msra.mxu0 %v283
    %349 = vmatprep.subr.bf16.mxu0 %v286
    %350 = vmatpush1.bf16.msra.mxu0 %v285
    %351 = vmatprep.subr.bf16.mxu0 %v288
    %352 = vmatpush1.bf16.msra.mxu0 %v287
    %353 = vmatprep.subr.bf16.mxu0 %v290
    %354 = vmatpush1.bf16.msra.mxu0 %v289
    %355 = vmatprep.subr.bf16.mxu0 %v292
    %356 = vmatpush1.bf16.msra.mxu0 %v291
    %357 = vmatprep.subr.bf16.mxu0 %v294
    %358 = vmatpush1.bf16.msra.mxu0 %v293
    %359 = vmatprep.subr.bf16.mxu0 %v296
    %360 = vmatpush1.bf16.msra.mxu0 %v295
    %361 = vmatprep.subr.bf16.mxu0 %v298
    %362 = vmatpush1.bf16.msra.mxu0 %v297
    %363 = vmatprep.subr.bf16.mxu0 %v300
    %364 = vmatpush1.bf16.msra.mxu0 %v299
    %365 = vmatprep.subr.bf16.mxu0 %v302
    %366 = vmatpush1.bf16.msra.mxu0 %v301
    %367 = vmatprep.subr.bf16.mxu0 %v304
    %368 = vmatpush1.bf16.msra.mxu0 %v303
    %369 = vmatprep.subr.bf16.mxu0 %v306
    %370 = vmatpush1.bf16.msra.mxu0 %v305
    %371 = vmatprep.mubr.bf16.mxu0 %v146
    %372 = vmatmul.mubr.bf16.gmra.mrb[0].mxu0 %v145
    %v373 = vpop.f32.mrb[0].mxu0
    %v374 = vadd.f32 0.0, %v373
    %v375 = vpop.f32.mrb[0].mxu0
    %v376 = vadd.f32 0.0, %v375
    %v377 = vpop.f32.mrb[0].mxu0
    %v378 = vpop.f32.mrb[0].mxu0
    %379 = vdwg.mxu0
    %v380 = vpack.c.bf16 %v374, %v374
    %v381 = vpack.c.bf16 %v376, %v376
    %v382 = vld [vmem:[%s4] sm:$0x3]
    %v384 = vlaneseq
    %v385 = vshrl.u32 %v384, 7
    %v386 = vsub.s32 0, %v385
    %v387 = vrot.slane %v382, %v386
    %v388 = vlaneseq
    %v389 = vshrl.u32 %v388, 7
    %v390 = vsub.s32 1, %v389
    %v391 = vrot.slane %v382, %v390
    %v394 = vpack.c.bf16 %v387, %v387
    %v395 = vpack.c.bf16 %v391, %v391
    %v397 = vpack.i.b16 %v394, %v394
    %v399 = vlaneseq
    %v400 = vshrl.u32 %v399, 7
    %v401 = vsub.s32 0, %v400
    %v402 = vrot.slane %v397, %v401
    %v404 = vpack.i.b16 %v395, %v395
    %v406 = vlaneseq
    %v407 = vshrl.u32 %v406, 7
    %v408 = vsub.s32 0, %v407
    %v409 = vrot.slane %v404, %v408
    %v410 = vadd.bf16 %v380, %v402
    %v411 = vadd.bf16 %v381, %v409
    %v412 = vmax.bf16 %v410, 0
    %v413 = vmax.bf16 %v411, 0
    %v414 = vld [vmem:[%s5] sm:$0xf]
    %v415 = vld [vmem:[%s5 + $0x4] sm:$0xf]
    %v416 = vld [vmem:[%s5 + $0x8] sm:$0xf]
    %v417 = vld [vmem:[%s5 + $0xc] sm:$0xf]
    %v418 = vld [vmem:[%s5 + $0x10] sm:$0xf]
    %v419 = vld [vmem:[%s5 + $0x14] sm:$0xf]
    %v420 = vld [vmem:[%s5 + $0x18] sm:$0xf]
    %v421 = vld [vmem:[%s5 + $0x1c] sm:$0xf]
    %v422 = vld [vmem:[%s5 + $0x20] sm:$0xf]
    %v423 = vld [vmem:[%s5 + $0x24] sm:$0xf]
    %v424 = vld [vmem:[%s5 + $0x28] sm:$0xf]
    %v425 = vld [vmem:[%s5 + $0x2c] sm:$0xf]
    %v426 = vld [vmem:[%s5 + $0x30] sm:$0xf]
    %v427 = vld [vmem:[%s5 + $0x34] sm:$0xf]
    %v428 = vld [vmem:[%s5 + $0x38] sm:$0xf]
    %v429 = vld [vmem:[%s5 + $0x3c] sm:$0xf]
    %v430 = vld [vmem:[%s5 + $0x40] sm:$0xf]
    %v431 = vld [vmem:[%s5 + $0x44] sm:$0xf]
    %v432 = vld [vmem:[%s5 + $0x48] sm:$0xf]
    %v433 = vld [vmem:[%s5 + $0x4c] sm:$0xf]
    %v434 = vld [vmem:[%s5 + $0x50] sm:$0xf]
    %v435 = vld [vmem:[%s5 + $0x54] sm:$0xf]
    %v436 = vld [vmem:[%s5 + $0x58] sm:$0xf]
    %v437 = vld [vmem:[%s5 + $0x5c] sm:$0xf]
    %v438 = vld [vmem:[%s5 + $0x60] sm:$0xf]
    %v439 = vld [vmem:[%s5 + $0x64] sm:$0xf]
    %v440 = vld [vmem:[%s5 + $0x68] sm:$0xf]
    %v441 = vld [vmem:[%s5 + $0x6c] sm:$0xf]
    %v442 = vld [vmem:[%s5 + $0x70] sm:$0xf]
    %v443 = vld [vmem:[%s5 + $0x74] sm:$0xf]
    %v444 = vld [vmem:[%s5 + $0x78] sm:$0xf]
    %v445 = vld [vmem:[%s5 + $0x7c] sm:$0xf]
    %v446 = vld [vmem:[%s6] sm:$0x1]
    %v448 = vlaneseq
    %v449 = vshrl.u32 %v448, 7
    %v450 = vsub.s32 0, %v449
    %v451 = vrot.slane %v446, %v450
    %v485 = vunpack.c.l.b16 %v414
    %v486 = vunpack.c.l.b16 %v415
    %v487 = vunpack.c.l.b16 %v416
    %v488 = vunpack.c.l.b16 %v417
    %v489 = vunpack.c.l.b16 %v418
    %v490 = vunpack.c.l.b16 %v419
    %v491 = vunpack.c.l.b16 %v420
    %v492 = vunpack.c.l.b16 %v421
    %v493 = vunpack.c.l.b16 %v422
    %v494 = vunpack.c.l.b16 %v423
    %v495 = vunpack.c.l.b16 %v424
    %v496 = vunpack.c.l.b16 %v425
    %v497 = vunpack.c.l.b16 %v426
    %v498 = vunpack.c.l.b16 %v427
    %v499 = vunpack.c.l.b16 %v428
    %v500 = vunpack.c.l.b16 %v429
    %v501 = vunpack.c.l.b16 %v430
    %v502 = vunpack.c.l.b16 %v431
    %v503 = vunpack.c.l.b16 %v432
    %v504 = vunpack.c.l.b16 %v433
    %v505 = vunpack.c.l.b16 %v434
    %v506 = vunpack.c.l.b16 %v435
    %v507 = vunpack.c.l.b16 %v436
    %v508 = vunpack.c.l.b16 %v437
    %v509 = vunpack.c.l.b16 %v438
    %v510 = vunpack.c.l.b16 %v439
    %v511 = vunpack.c.l.b16 %v440
    %v512 = vunpack.c.l.b16 %v441
    %v513 = vunpack.c.l.b16 %v442
    %v514 = vunpack.c.l.b16 %v443
    %v515 = vunpack.c.l.b16 %v444
    %v516 = vunpack.c.l.b16 %v445
    %v517 = vpack.c.b16 %v486, %v485
    %v518 = vpack.c.b16 %v488, %v487
    %v519 = vpack.c.b16 %v490, %v489
    %v520 = vpack.c.b16 %v492, %v491
    %v521 = vpack.c.b16 %v494, %v493
    %v522 = vpack.c.b16 %v496, %v495
    %v523 = vpack.c.b16 %v498, %v497
    %v524 = vpack.c.b16 %v500, %v499
    %v525 = vpack.c.b16 %v502, %v501
    %v526 = vpack.c.b16 %v504, %v503
    %v527 = vpack.c.b16 %v506, %v505
    %v528 = vpack.c.b16 %v508, %v507
    %v529 = vpack.c.b16 %v510, %v509
    %v530 = vpack.c.b16 %v512, %v511
    %v531 = vpack.c.b16 %v514, %v513
    %v532 = vpack.c.b16 %v516, %v515
    %549 = vmatprep.subr.bf16.mxu0 0
    %550 = vmatpush1.bf16.msra.mxu0 %v517
    %551 = vmatprep.subr.bf16.mxu0 0
    %552 = vmatpush1.bf16.msra.mxu0 %v518
    %553 = vmatprep.subr.bf16.mxu0 0
    %554 = vmatpush1.bf16.msra.mxu0 %v519
    %555 = vmatprep.subr.bf16.mxu0 0
    %556 = vmatpush1.bf16.msra.mxu0 %v520
    %557 = vmatprep.subr.bf16.mxu0 0
    %558 = vmatpush1.bf16.msra.mxu0 %v521
    %559 = vmatprep.subr.bf16.mxu0 0
    %560 = vmatpush1.bf16.msra.mxu0 %v522
    %561 = vmatprep.subr.bf16.mxu0 0
    %562 = vmatpush1.bf16.msra.mxu0 %v523
    %563 = vmatprep.subr.bf16.mxu0 0
    %564 = vmatpush1.bf16.msra.mxu0 %v524
    %565 = vmatprep.subr.bf16.mxu0 0
    %566 = vmatpush1.bf16.msra.mxu0 %v525
    %567 = vmatprep.subr.bf16.mxu0 0
    %568 = vmatpush1.bf16.msra.mxu0 %v526
    %569 = vmatprep.subr.bf16.mxu0 0
    %570 = vmatpush1.bf16.msra.mxu0 %v527
    %571 = vmatprep.subr.bf16.mxu0 0
    %572 = vmatpush1.bf16.msra.mxu0 %v528
    %573 = vmatprep.subr.bf16.mxu0 0
    %574 = vmatpush1.bf16.msra.mxu0 %v529
    %575 = vmatprep.subr.bf16.mxu0 0
    %576 = vmatpush1.bf16.msra.mxu0 %v530
    %577 = vmatprep.subr.bf16.mxu0 0
    %578 = vmatpush1.bf16.msra.mxu0 %v531
    %579 = vmatprep.subr.bf16.mxu0 0
    %580 = vmatpush1.bf16.msra.mxu0 %v532
    %581 = vmatprep.mubr.bf16.mxu0 %v413
    %582 = vmatmul.mubr.bf16.gmra.mrb[0].mxu0 %v412
    %v583 = vpop.f32.mrb[0].mxu0
    %v584 = vadd.f32 %v451, %v583
    %v585 = vpop.f32.mrb[0].mxu0
    %v586 = vpop.f32.mrb[0].mxu0
    %v587 = vpop.f32.mrb[0].mxu0
    %588 = vdwg.mxu0
    %vm589 = vcmask 64512
    %590 = vst.msk [vmem:[#allocation5] sm:$0xff] %vm589, %v584
    // Predicated region
    $region34: #{_qnetwork_forward_impl.1} parent=1 // pred_check
      _
    $region35: #{_qnetwork_forward_impl.1} parent=1 // pred_check_branch
      %592 = sbr.rel (0) target = $region37
    $region36: #{_qnetwork_forward_impl.1} parent=1 // pred_region
      %s594 = ssub.s32 128, 128
      %595 = vsyncadd [#allocation4], %s594
      %s597 = sshll.u32 [#allocation5], 4
      %s598 = int_to_ptr.vmem [resolvable:$true] %s597
      %600 = dma.vmem_to_hbm [thread:$0]  %s598, 128, %s7, [#allocation4]
    $region37: #{_qnetwork_forward_impl.1} parent=1 // pred_fallthru
      _
    // Predicated region
    $region38: #{_qnetwork_forward_impl.1} parent=1 // pred_check
      _
    $region39: #{_qnetwork_forward_impl.1} parent=1 // pred_check_branch
      %602 = sbr.rel (0) target = $region41
    $region40: #{_qnetwork_forward_impl.1} parent=1 // pred_region
      %603 = dma.done [#allocation4], 128
    $region41: #{_qnetwork_forward_impl.1} parent=1 // pred_fallthru
      _
    %604 = vsyncpa [#allocation3], 1
    %605 = vsyncpa [#allocation4], 1

</llo_original>
